<compile_context>
chip_gen: v7x
topology: tpu7x:2x2x1
jax: 0.10.0
libtpu: 0.0.40
codegen_flags: <defaults>
</compile_context>

<pallas_src>
import functools

import jax
import jax.numpy as jnp
import numpy as np
from jax.experimental import pallas as pl
from jax.experimental.pallas import tpu as pltpu


# ----------------------------------------------------------------------------
# Pallas kernel
# ----------------------------------------------------------------------------
def _flatten_loss_kernel(a_ref, vhi_ref, vlo_ref, t_ref, o_ref, acc_ref,
                         *, tk, v_resident):
    # a_ref   : [tm, tk]        bf16  integer neighbor counts (region rows)
    # vhi_ref : [tk|k_pad, 128] bf16  hi part of vertex panel (xyz in lanes 0..2)
    # vlo_ref : [tk|k_pad, 128] bf16  lo part of vertex panel
    # t_ref   : [tm, 128]       f32   lanes 0..2 = target vertices, lane 3 = 1/deg
    # o_ref   : [8, 128]        f32   per-row-tile sublane-reduced squared error
    # acc_ref : VMEM [tm, 128]  f32   accumulator, resident across the K axis
    k = pl.program_id(1)
    nk = pl.num_programs(1)

    @pl.when(k == 0)
    def _():
        acc_ref[...] = jnp.zeros_like(acc_ref)

    if v_resident:
        # Whole vertex panel stays resident in VMEM; slice the current K tile.
        off = pl.multiple_of(k * tk, tk)
        vhi = vhi_ref[pl.ds(off, tk), :]
        vlo = vlo_ref[pl.ds(off, tk), :]
    else:
        vhi = vhi_ref[...]
        vlo = vlo_ref[...]

    a = a_ref[...]
    acc_ref[...] += (jnp.dot(a, vhi, preferred_element_type=jnp.float32)
                     + jnp.dot(a, vlo, preferred_element_type=jnp.float32))

    @pl.when(k == nk - 1)
    def _():
        t = t_ref[...]                       # [tm, 128]
        inv_deg = t[:, 3:4]                  # [tm, 1] f32 per-row 1/deg
        diff = acc_ref[...] * inv_deg - t    # lanes 0..2 real; lane 3 spurious
        sq = diff * diff
        lane = jax.lax.broadcasted_iota(jnp.int32, sq.shape, 1)
        sq = jnp.where(lane < 3, sq, 0.0)    # zero lane 3 (held 1/deg) and pads
        rows = sq.shape[0]
        partial = sq[0:8, :]
        for s in range(1, rows // 8):        # static sublane reduction -> (8,128)
            partial = partial + sq[s * 8:(s + 1) * 8, :]
        o_ref[...] = partial


def _round_up(x, m):
    return ((x + m - 1) // m) * m


# ----------------------------------------------------------------------------
# One-time (per mesh topology) operator construction — hoisted out of the hot path
# ----------------------------------------------------------------------------
def build_flatten_loss_operator(neighbor_indices_ori, num_vertices,
                                region_indices, *, tm=512, tk=2048,
                                lane_pad=128):
    """Precompute padded bf16 integer-count operator + f32 1/deg + tiling meta."""
    V = num_vertices
    region_rows = np.array(sorted(set(int(i) for i in region_indices)),
                           dtype=np.int32)
    R = len(region_rows)

    # Tile sizing: tm multiple of 16 (bf16 sublane packing), tk multiple of 128.
    tm = _round_up(min(tm, _round_up(R, 16)), 16)
    if _round_up(R, tm) // tm < 2 and R >= 32:
        # Prefer >= 2 row tiles so the "parallel" axis can use both TCs on v7x.
        tm = _round_up((R + 1) // 2, 16)
    tk = _round_up(min(tk, _round_up(V, 128)), 128)
    m_pad = _round_up(R, tm)
    k_pad = _round_up(V, tk)

    # Dense region-compacted neighbor-count operator (counts are exact in bf16).
    counts = np.zeros((m_pad, k_pad), dtype=np.float32)
    inv_deg = np.zeros((m_pad,), dtype=np.float32)
    for r, vi in enumerate(region_rows):
        lst = neighbor_indices_ori[vi]
        if len(lst) > 0:                      # guard zero-degree vertices
            inv_deg[r] = 1.0 / float(len(lst))
        for j in lst:
            counts[r, int(j)] += 1.0

    a_counts = jnp.asarray(counts, dtype=jnp.bfloat16)
    inv_deg = jnp.asarray(inv_deg, dtype=jnp.float32)
    meta = dict(R=R, V=V, tm=tm, tk=tk, m_pad=m_pad, k_pad=k_pad,
                lane_pad=lane_pad, region_rows=jnp.asarray(region_rows))
    return a_counts, inv_deg, meta


# ----------------------------------------------------------------------------
# Per-call wrapper (only vertex-dependent, small prep happens here)
# ----------------------------------------------------------------------------
def flatten_loss_pallas(vertices, a_counts, inv_deg, meta,
                        *, v_resident_bytes=8 * 1024 * 1024):
    R, V = meta["R"], meta["V"]
    tm, tk = meta["tm"], meta["tk"]
    m_pad, k_pad = meta["m_pad"], meta["k_pad"]
    lane_pad = meta["lane_pad"]
    region_rows = meta["region_rows"]
    C = vertices.shape[1]
    assert C == 3, "FlattenLoss_v2 operates on 3-D vertices"

    vert32 = vertices.astype(jnp.float32)

    # hi/lo bf16 split of the (small) vertex panel -> near-f32 matmul accuracy.
    v_pad = jnp.zeros((k_pad, lane_pad), jnp.float32).at[:V, :C].set(vert32)
    v_hi = v_pad.astype(jnp.bfloat16)
    v_lo = (v_pad - v_hi.astype(jnp.float32)).astype(jnp.bfloat16)

    # Target block: lanes 0..2 = region vertices (f32), lane 3 = f32 1/deg.
    t = jnp.zeros((m_pad, lane_pad), jnp.float32)
    t = t.at[:R, :C].set(vert32[region_rows])
    t = t.at[:, 3].set(inv_deg)

    m_tiles = m_pad // tm
    k_tiles = k_pad // tk
    v_resident = (2 * k_pad * lane_pad * 2) <= v_resident_bytes

    if v_resident:
        v_spec = pl.BlockSpec((k_pad, lane_pad), lambda i, k: (0, 0))
    else:
        v_spec = pl.BlockSpec((tk, lane_pad), lambda i, k: (k, 0))

    kernel = functools.partial(_flatten_loss_kernel, tk=tk,
                               v_resident=v_resident)

    # VMEM budget (double-buffered inputs/outputs + accumulator scratch),
    # capped at 48 MiB so it is valid on v7x (64 MiB physical VMEM).
    vmem_est = (2 * tm * tk * 2
                + (2 * k_pad * lane_pad * 2 if v_resident
                   else 2 * 2 * tk * lane_pad * 2)
                + 2 * tm * lane_pad * 4
                + 2 * 8 * lane_pad * 4
                + tm * lane_pad * 4)
    vmem_limit = int(min(max(32 * 1024 * 1024, 2 * vmem_est),
                         48 * 1024 * 1024))

    partials = pl.pallas_call(
        kernel,
        out_shape=jax.ShapeDtypeStruct((m_tiles * 8, lane_pad), jnp.float32),
        grid_spec=pltpu.PrefetchScalarGridSpec(
            num_scalar_prefetch=0,
            grid=(m_tiles, k_tiles),
            in_specs=[
                pl.BlockSpec((tm, tk), lambda i, k: (i, k)),
                v_spec,
                v_spec,
                pl.BlockSpec((tm, lane_pad), lambda i, k: (i, 0)),
            ],
            out_specs=pl.BlockSpec((8, lane_pad), lambda i, k: (i, 0)),
            scratch_shapes=[pltpu.VMEM((tm, lane_pad), jnp.float32)],
        ),
        compiler_params=pltpu.CompilerParams(
            dimension_semantics=("parallel", "arbitrary"),
            vmem_limit_bytes=vmem_limit),
    )(a_counts, v_hi, v_lo, t)

    # Tiny static-size final reduction + MSE normalization over R*3 elements.
    return jnp.sum(partials) / float(R * C)


# ----------------------------------------------------------------------------
# Pure-JAX reference (mirrors the PyTorch forward exactly)
# ----------------------------------------------------------------------------
def flatten_loss_ref(vertices, neighbor_indices_padded, mask, neighbor_num,
                     region_rows):
    mask3 = jnp.repeat(mask[:, :, None], 3, axis=-1)              # [V, max_ns, 3]
    neighbor_pos = vertices[neighbor_indices_padded] * mask3      # [V, max_ns, 3]
    pos_sum = jnp.sum(neighbor_pos, axis=1)                       # [V, 3]
    ave_pos = pos_sum / neighbor_num[:, None]                     # [V, 3]
    r = jnp.asarray(region_rows, dtype=jnp.int32)
    return jnp.mean((ave_pos[r] - vertices[r]) ** 2)


# ----------------------------------------------------------------------------
# Demo
# ----------------------------------------------------------------------------
if __name__ == "__main__":
    def run_case(V, MAX_NS, region_stride, seed, tm, tk,
                 v_resident_bytes=8 * 1024 * 1024):
        key = jax.random.PRNGKey(seed)
        k_vert, k_cnt, k_idx = jax.random.split(key, 3)

        # Deterministic synthetic mesh connectivity (stand-in for `variables`).
        counts = np.asarray(jax.random.randint(k_cnt, (V,), 3, MAX_NS + 1))
        all_idx = np.asarray(jax.random.randint(k_idx, (V, MAX_NS), 0, V))
        neighbor_indices_ori = [list(all_idx[i, :counts[i]]) for i in range(V)]
        neighbor_indices_padded = all_idx.copy()
        for i in range(V):
            neighbor_indices_padded[i, counts[i]:] = 0
        mask = np.zeros((V, MAX_NS), dtype=np.float32)
        for i in range(V):
            mask[i, :counts[i]] = 1.0
        neighbor_num = counts.astype(np.float32)

        # region_mask: behaves as pre_mask = every `region_stride`-th vertex.
        region_indices = list(range(0, V, region_stride))

        vertices = jax.random.normal(k_vert, (V, 3), dtype=jnp.float32)

        # One-time topology-dependent prep (hoisted out of the per-call path).
        a_counts, inv_deg, meta = build_flatten_loss_operator(
            neighbor_indices_ori, V, region_indices, tm=tm, tk=tk)

        loss = flatten_loss_pallas(vertices, a_counts, inv_deg, meta,
                                   v_resident_bytes=v_resident_bytes)
        loss = float(jax.block_until_ready(loss))

        ref = flatten_loss_ref(vertices, jnp.asarray(neighbor_indices_padded),
                               jnp.asarray(mask), jnp.asarray(neighbor_num),
                               meta["region_rows"])
        ref = float(jax.block_until_ready(ref))

        assert np.allclose(loss, ref, rtol=1e-3, atol=1e-6), \
            f"mismatch (V={V}): pallas={loss} ref={ref}"

    # Small case: single K tile, resident vertex panel, 2 row tiles.
    run_case(V=128, MAX_NS=8, region_stride=2, seed=0, tm=512, tk=2048)
    # Multi-tile grid: 3 row tiles x 4 K tiles, resident panel + dynamic slice.
    run_case(V=512, MAX_NS=6, region_stride=3, seed=0, tm=64, tk=128)
    # Same grid but forcing the non-resident (per-K-tile streamed) vertex path.
    run_case(V=512, MAX_NS=6, region_stride=3, seed=1, tm=64, tk=128,
             v_resident_bytes=0)

    print("KERNEL_OK")
</pallas_src>

<mosaic_0001>
module attributes {stable_mosaic.version = 11 : i64} {
  func.func @_flatten_loss_kernel(%arg0: i32, %arg1: i32, %arg2: memref<32x128xbf16, #tpu.memory_space<vmem>>, %arg3: memref<128x128xbf16, #tpu.memory_space<vmem>>, %arg4: memref<128x128xbf16, #tpu.memory_space<vmem>>, %arg5: memref<32x128xf32, #tpu.memory_space<vmem>>, %arg6: memref<8x128xf32, #tpu.memory_space<vmem>>, %arg7: memref<32x128xf32, #tpu.memory_space<vmem>>) attributes {dimension_semantics = [#tpu.dimension_semantics<parallel>, #tpu.dimension_semantics<arbitrary>], iteration_bounds = array<i64: 2, 1>, scalar_prefetch = 0 : i64, scratch_operands = 1 : i64, tpu.core_type = #tpu.core_type<tc>, window_params = [{transform_indices = @transform_0, window_bounds = array<i64: 32, 128>}, {pipeline_mode = #tpu.pipeline_mode<synchronous>, transform_indices = @transform_1, window_bounds = array<i64: 128, 128>}, {pipeline_mode = #tpu.pipeline_mode<synchronous>, transform_indices = @transform_2, window_bounds = array<i64: 128, 128>}, {transform_indices = @transform_3, window_bounds = array<i64: 32, 128>}, {transform_indices = @transform_4, window_bounds = array<i64: 8, 128>}]} {
    %c0_i32 = arith.constant 0 : i32
    %0 = arith.cmpi eq, %arg1, %c0_i32 : i32
    %1 = arith.extui %0 : i1 to i32
    %c0_i32_0 = arith.constant 0 : i32
    %2 = arith.cmpi ne, %1, %c0_i32_0 : i32
    scf.if %2 {
      %cst_11 = arith.constant 0.000000e+00 : f32
      %19 = vector.broadcast %cst_11 : f32 to vector<32x128xf32>
      %c0_12 = arith.constant 0 : index
      %c0_13 = arith.constant 0 : index
      %20 = vector.load %arg7[%c0_12, %c0_13] : memref<32x128xf32, #tpu.memory_space<vmem>>, vector<32x128xf32>
      tpu.vector_store %arg7[%c0_12, %c0_13], %19 {strides = array<i32>} : memref<32x128xf32, #tpu.memory_space<vmem>>, vector<32x128xf32>,
    } else {
    }
    %c128_i32 = arith.constant 128 : i32
    %3 = arith.muli %arg1, %c128_i32 : i32
    %4 = tpu.assume_multiple %3, 128 : i32
    %5 = arith.index_cast %4 : i32 to index
    %c0 = arith.constant 0 : index
    %6 = vector.load %arg3[%5, %c0] : memref<128x128xbf16, #tpu.memory_space<vmem>>, vector<128x128xbf16>
    %7 = arith.index_cast %4 : i32 to index
    %c0_1 = arith.constant 0 : index
    %8 = vector.load %arg4[%7, %c0_1] : memref<128x128xbf16, #tpu.memory_space<vmem>>, vector<128x128xbf16>
    %c0_2 = arith.constant 0 : index
    %c0_3 = arith.constant 0 : index
    %9 = vector.load %arg2[%c0_2, %c0_3] : memref<32x128xbf16, #tpu.memory_space<vmem>>, vector<32x128xbf16>
    %c0_4 = arith.constant 0 : index
    %c0_5 = arith.constant 0 : index
    %10 = vector.load %arg7[%c0_4, %c0_5] : memref<32x128xf32, #tpu.memory_space<vmem>>, vector<32x128xf32>
    %cst = arith.constant dense<0.000000e+00> : vector<32x128xf32>
    %11 = tpu.matmul %9, %6, %cst {dimension_numbers = #tpu.dot_dimension_numbers<[1], [0], [0], [1], [0, 0, 1, 1], [], []>} : vector<32x128xbf16>, vector<128x128xbf16>, vector<32x128xf32> -> vector<32x128xf32>
    %cst_6 = arith.constant dense<0.000000e+00> : vector<32x128xf32>
    %12 = tpu.matmul %9, %8, %cst_6 {dimension_numbers = #tpu.dot_dimension_numbers<[1], [0], [0], [1], [0, 0, 1, 1], [], []>} : vector<32x128xbf16>, vector<128x128xbf16>, vector<32x128xf32> -> vector<32x128xf32>
    %13 = arith.addf %11, %12 : vector<32x128xf32>
    %14 = arith.addf %10, %13 : vector<32x128xf32>
    %c0_7 = arith.constant 0 : index
    %c0_8 = arith.constant 0 : index
    %15 = vector.load %arg7[%c0_7, %c0_8] : memref<32x128xf32, #tpu.memory_space<vmem>>, vector<32x128xf32>
    tpu.vector_store %arg7[%c0_7, %c0_8], %14 {strides = array<i32>} : memref<32x128xf32, #tpu.memory_space<vmem>>, vector<32x128xf32>,
    %c0_i32_9 = arith.constant 0 : i32
    %16 = arith.cmpi eq, %arg1, %c0_i32_9 : i32
    %17 = arith.extui %16 : i1 to i32
    %c0_i32_10 = arith.constant 0 : i32
    %18 = arith.cmpi ne, %17, %c0_i32_10 : i32
    scf.if %18 {
      %c0_11 = arith.constant 0 : index
      %c0_12 = arith.constant 0 : index
      %19 = vector.load %arg5[%c0_11, %c0_12] : memref<32x128xf32, #tpu.memory_space<vmem>>, vector<32x128xf32>
      %20 = vector.extract_strided_slice %19 {offsets = [0, 3], sizes = [32, 1], strides = [1, 1]} : vector<32x128xf32> to vector<32x1xf32>
      %c0_13 = arith.constant 0 : index
      %c0_14 = arith.constant 0 : index
      %21 = vector.load %arg7[%c0_13, %c0_14] : memref<32x128xf32, #tpu.memory_space<vmem>>, vector<32x128xf32>
      %22 = vector.broadcast %20 : vector<32x1xf32> to vector<32x128xf32>
      %23 = arith.mulf %21, %22 : vector<32x128xf32>
      %24 = arith.subf %23, %19 : vector<32x128xf32>
      %25 = arith.mulf %24, %24 : vector<32x128xf32>
      %26 = tpu.iota {dimensions = array<i32: 1>} : vector<32x128xi32>
      %c3_i32 = arith.constant 3 : i32
      %27 = vector.broadcast %c3_i32 : i32 to vector<32x128xi32>
      %28 = arith.cmpi slt, %26, %27 : vector<32x128xi32>
      %cst_15 = arith.constant 0.000000e+00 : f32
      %29 = vector.broadcast %cst_15 : f32 to vector<32x128xf32>
      %30 = arith.select %28, %25, %29 : vector<32x128xi1>, vector<32x128xf32>
      %31 = vector.extract_strided_slice %30 {offsets = [0, 0], sizes = [8, 128], strides = [1, 1]} : vector<32x128xf32> to vector<8x128xf32>
      %32 = vector.extract_strided_slice %30 {offsets = [8, 0], sizes = [8, 128], strides = [1, 1]} : vector<32x128xf32> to vector<8x128xf32>
      %33 = arith.addf %31, %32 : vector<8x128xf32>
      %34 = vector.extract_strided_slice %30 {offsets = [16, 0], sizes = [8, 128], strides = [1, 1]} : vector<32x128xf32> to vector<8x128xf32>
      %35 = arith.addf %33, %34 : vector<8x128xf32>
      %36 = vector.extract_strided_slice %30 {offsets = [24, 0], sizes = [8, 128], strides = [1, 1]} : vector<32x128xf32> to vector<8x128xf32>
      %37 = arith.addf %35, %36 : vector<8x128xf32>
      %c0_16 = arith.constant 0 : index
      %c0_17 = arith.constant 0 : index
      %38 = vector.load %arg6[%c0_16, %c0_17] : memref<8x128xf32, #tpu.memory_space<vmem>>, vector<8x128xf32>
      tpu.vector_store %arg6[%c0_16, %c0_17], %37 {strides = array<i32>} : memref<8x128xf32, #tpu.memory_space<vmem>>, vector<8x128xf32>,
    } else {
    }
    return
  }
  func.func @transform_0(%arg0: i32, %arg1: i32) -> (i32, i32) {
    %c0_i32 = arith.constant 0 : i32
    return %arg0, %arg1 : i32, i32
  }
  func.func @transform_1(%arg0: i32, %arg1: i32) -> (i32, i32) {
    %c0_i32 = arith.constant 0 : i32
    %c0_i32_0 = arith.constant 0 : i32
    %c0_i32_1 = arith.constant 0 : i32
    return %c0_i32, %c0_i32_0 : i32, i32
  }
  func.func @transform_2(%arg0: i32, %arg1: i32) -> (i32, i32) {
    %c0_i32 = arith.constant 0 : i32
    %c0_i32_0 = arith.constant 0 : i32
    %c0_i32_1 = arith.constant 0 : i32
    return %c0_i32, %c0_i32_0 : i32, i32
  }
  func.func @transform_3(%arg0: i32, %arg1: i32) -> (i32, i32) {
    %c0_i32 = arith.constant 0 : i32
    %c0_i32_0 = arith.constant 0 : i32
    return %arg0, %c0_i32 : i32, i32
  }
  func.func @transform_4(%arg0: i32, %arg1: i32) -> (i32, i32) {
    %c0_i32 = arith.constant 0 : i32
    %c0_i32_0 = arith.constant 0 : i32
    return %arg0, %c0_i32 : i32, i32
  }
}

</mosaic_0001>

<llo_original>
// kernel: tpu_custom_call.1
$region0: #{tpu_custom_call.1}
  #allocation0 [shape = 'u32[]', space=smem, size = 0x4, offset = 0x4, fixed_abs, tag = 'smem constant byte address 0x4 - core index']
  #allocation1 [shape = 'u32[144,128]{1,0:T(1,128)}', space=vmem, size = 0x12000, scoped, tag = 'internal scratch']
  #allocation2 [shape = 'f32[32,128]{1,0:T(8,128)}', space=vmem, size = 0x4000, scoped, tag = 'scratch operand']
  %s0 = inlined_call_operand.hbm [shape: bf16[64,128], index: 0, kind: input, shape index: {}]
  %s1 = inlined_call_operand.hbm [shape: bf16[128,128], index: 1, kind: input, shape index: {}]
  %s2 = inlined_call_operand.hbm [shape: bf16[128,128], index: 2, kind: input, shape index: {}]
  %s3 = inlined_call_operand.hbm [shape: f32[64,128], index: 3, kind: input, shape index: {}]
  %s4 = inlined_call_operand.hbm [shape: f32[16,128], index: 4, kind: output, shape index: {}]
  %s5 = sld [smem:[#allocation0]]
  $region73: #{tpu_custom_call.1} parent=0
    _
  %s7 = ssub.s32 1, %s5
  %s8 = scalar_select 0, %s7, %s5
  $region1: #{tpu_custom_call.1} parent=0
    #allocation3 [shape = 'u8[16384]{0}', space=vmem, size = 0x4000, scoped, tag = 'input window, operand 0']
    #allocation4 [shape = 's32[2]{0}', space=sflag, size = 0x8, scoped, tag = 'scoped memory for tpu_custom_call.1']
    #allocation5 [shape = 's32[2]{0}', space=sflag, size = 0x8, scoped, tag = 'scoped memory for tpu_custom_call.1']
    #allocation6 [shape = 'u8[32768]{0}', space=vmem, size = 0x8000, scoped, tag = 'input window, operand 1, single buffered']
    #allocation7 [shape = 's32[1]{0}', space=sflag, size = 0x4, scoped, tag = 'scoped memory for tpu_custom_call.1']
    #allocation8 [shape = 'u8[32768]{0}', space=vmem, size = 0x8000, scoped, tag = 'input window, operand 2, single buffered']
    #allocation9 [shape = 'u8[32768]{0}', space=vmem, size = 0x8000, scoped, tag = 'input window, operand 3']
    #allocation10 [shape = 's32[2]{0}', space=sflag, size = 0x8, scoped, tag = 'scoped memory for tpu_custom_call.1']
    #allocation11 [shape = 'u8[8192]{0}', space=vmem, size = 0x2000, scoped, tag = 'output window, operand 0']
    %9 = vsyncpa [#allocation4], 0
    %s10 = scalar_lea.sflag [#allocation4], 1
    %11 = vsyncpa %s10, 0
    %12 = vsyncpa [#allocation7], 0
    %13 = vsyncpa [#allocation10], 0
    %s14 = scalar_lea.sflag [#allocation10], 1
    %15 = vsyncpa %s14, 0
    %16 = vsyncpa [#allocation5], 0
    %s17 = scalar_lea.sflag [#allocation5], 1
    %18 = vsyncpa %s17, 0
    loop: start=0, step=1, limit=4
    $region2: #{tpu_custom_call.1} parent=1 // loop_pre_header
      _
    $region3: #{tpu_custom_call.1} parent=1 // loop_header
      %s20 = sphi 0, %s24
      %p21 = scmp.ge.s32.totalorder %s20, 4
      %s27 = sphi 0, %s39
      %s28 = sphi 0, %s35
      %s29 = sphi 0, %s27
      %s30 = sphi 0, %s28
      %s31 = sphi 0, %s29
      %s32 = sphi 0, %s30
      %s44 = sphi 0, %s46
      %s47 = sphi 0, %s44
      %s48 = sphi 0, %s47
      %s64 = sphi 0, %s48
      %s68 = sphi 0, %s68
      %s70 = sphi 0, %s68
      %s71 = sphi 0, %s70
      %s85 = sphi 0, %s71
      %s89 = sphi 0, %s89
      %s91 = sphi 0, %s89
      %s92 = sphi 0, %s91
      %s106 = sphi 0, %s92
      %s112 = sphi 0, %s114
      %s115 = sphi 0, %s112
      %s116 = sphi 0, %s115
      %s132 = sphi 0, %s116
      %s138 = sphi 0, %s140
      %s141 = sphi 0, %s138
      %s142 = sphi 0, %s141
      %s158 = sphi 0, %s142
    $region4: #{tpu_custom_call.1} parent=1 // loop_header_branch
      %23 = sbr.rel (%p21) target = $region8
    $region5: #{tpu_custom_call.1} parent=1 // loop_body
      %s25 = ssub.s32 %s20, 1
      %s26 = ssub.s32 %s20, 2
      %s33 = sadd.s32 1, %s28
      %p34 = scmp.ge.s32.totalorder %s33, 1
      %s35 = scalar_select %p34, 0, %s33
      %s36 = sadd.s32 1, %s27
      %s37 = scalar_select %p34, %s36, %s27
      %p38 = scmp.ge.s32.totalorder %s37, 2
      %s39 = scalar_select %p38, 0, %s37
      %s40 = ssub.s32 %s27, %s39
      %s41 = ssub.s32 %s28, %s35
      %s42 = sor.u32 %s40, %s41
      %p43 = scmp.eq.s32.totalorder %s42, 0
      %s45 = sadd.s32 %s44, 1
      %s46 = scalar_select %p43, %s44, %s45
      %p49 = pneg %p43
      %p50 = scmp.eq.s32.totalorder %s20, 1
      %p51 = por %p49, %p50
      %p52 = scmp.ne.s32.totalorder %s44, %s47
      %p53 = scmp.eq.s32.totalorder %s20, 0
      %p54 = por %p52, %p53
      %p55 = scmp.ne.s32.totalorder %s44, %s47
      %p56 = scmp.eq.s32.totalorder %s25, 1
      %p57 = por %p55, %p56
      %p58 = scmp.ne.s32.totalorder %s47, %s48
      %p59 = scmp.eq.s32.totalorder %s25, 0
      %p60 = por %p58, %p59
      %p61 = scmp.ne.s32.totalorder %s47, %s48
      %p62 = scmp.eq.s32.totalorder %s26, 1
      %p63 = por %p61, %p62
      %p65 = scmp.ne.s32.totalorder %s48, %s64
      %p66 = scmp.eq.s32.totalorder %s26, 0
      %p67 = por %p65, %p66
      %s69 = sadd.s32 %s68, 1
      %p72 = scmp.eq.s32.totalorder %s20, 1
      %p73 = scmp.ne.s32.totalorder %s68, %s70
      %p74 = scmp.eq.s32.totalorder %s20, 0
      %p75 = por %p73, %p74
      %p76 = scmp.ne.s32.totalorder %s68, %s70
      %p77 = scmp.eq.s32.totalorder %s25, 1
      %p78 = por %p76, %p77
      %p79 = scmp.ne.s32.totalorder %s70, %s71
      %p80 = scmp.eq.s32.totalorder %s25, 0
      %p81 = por %p79, %p80
      %p82 = scmp.ne.s32.totalorder %s70, %s71
      %p83 = scmp.eq.s32.totalorder %s26, 1
      %p84 = por %p82, %p83
      %p86 = scmp.ne.s32.totalorder %s71, %s85
      %p87 = scmp.eq.s32.totalorder %s26, 0
      %p88 = por %p86, %p87
      %s90 = sadd.s32 %s89, 1
      %p93 = scmp.eq.s32.totalorder %s20, 1
      %p94 = scmp.ne.s32.totalorder %s89, %s91
      %p95 = scmp.eq.s32.totalorder %s20, 0
      %p96 = por %p94, %p95
      %p97 = scmp.ne.s32.totalorder %s89, %s91
      %p98 = scmp.eq.s32.totalorder %s25, 1
      %p99 = por %p97, %p98
      %p100 = scmp.ne.s32.totalorder %s91, %s92
      %p101 = scmp.eq.s32.totalorder %s25, 0
      %p102 = por %p100, %p101
      %p103 = scmp.ne.s32.totalorder %s91, %s92
      %p104 = scmp.eq.s32.totalorder %s26, 1
      %p105 = por %p103, %p104
      %p107 = scmp.ne.s32.totalorder %s92, %s106
      %p108 = scmp.eq.s32.totalorder %s26, 0
      %p109 = por %p107, %p108
      %s110 = ssub.s32 %s27, %s39
      %p111 = scmp.eq.s32.totalorder %s110, 0
      %s113 = sadd.s32 %s112, 1
      %s114 = scalar_select %p111, %s112, %s113
      %p117 = pneg %p111
      %p118 = scmp.eq.s32.totalorder %s20, 1
      %p119 = por %p117, %p118
      %p120 = scmp.ne.s32.totalorder %s112, %s115
      %p121 = scmp.eq.s32.totalorder %s20, 0
      %p122 = por %p120, %p121
      %p123 = scmp.ne.s32.totalorder %s112, %s115
      %p124 = scmp.eq.s32.totalorder %s25, 1
      %p125 = por %p123, %p124
      %p126 = scmp.ne.s32.totalorder %s115, %s116
      %p127 = scmp.eq.s32.totalorder %s25, 0
      %p128 = por %p126, %p127
      %p129 = scmp.ne.s32.totalorder %s115, %s116
      %p130 = scmp.eq.s32.totalorder %s26, 1
      %p131 = por %p129, %p130
      %p133 = scmp.ne.s32.totalorder %s116, %s132
      %p134 = scmp.eq.s32.totalorder %s26, 0
      %p135 = por %p133, %p134
      %s136 = ssub.s32 %s27, %s39
      %p137 = scmp.eq.s32.totalorder %s136, 0
      %s139 = sadd.s32 %s138, 1
      %s140 = scalar_select %p137, %s138, %s139
      %p143 = pneg %p137
      %p144 = scmp.eq.s32.totalorder %s20, 1
      %p145 = por %p143, %p144
      %p146 = scmp.ne.s32.totalorder %s138, %s141
      %p147 = scmp.eq.s32.totalorder %s20, 0
      %p148 = por %p146, %p147
      %p149 = scmp.ne.s32.totalorder %s138, %s141
      %p150 = scmp.eq.s32.totalorder %s25, 1
      %p151 = por %p149, %p150
      %p152 = scmp.ne.s32.totalorder %s141, %s142
      %p153 = scmp.eq.s32.totalorder %s25, 0
      %p154 = por %p152, %p153
      %p155 = scmp.ne.s32.totalorder %s141, %s142
      %p156 = scmp.eq.s32.totalorder %s26, 1
      %p157 = por %p155, %p156
      %p159 = scmp.ne.s32.totalorder %s142, %s158
      %p160 = scmp.eq.s32.totalorder %s26, 0
      %p161 = por %p159, %p160
      %p162 = scmp.le.s32.totalorder 1, %s20
      %p163 = scmp.lt.s32.totalorder %s20, 3
      %p164 = pnand %p162, %p163
      %p165 = pneg %p164
      // Predicated region
      $region9: #{tpu_custom_call.1} parent=5 // pred_check
        _
      $region10: #{tpu_custom_call.1} parent=5 // pred_check_branch
        %167 = sbr.rel (%p164) target = $region12
      $region11: #{tpu_custom_call.1} parent=5 // pred_region
        %s168 = ssub.s32 %s20, 1
        // Predicated region
        $region13: #{tpu_custom_call.1} parent=11 // pred_check
          %p169 = pneg %p81
        $region14: #{tpu_custom_call.1} parent=11 // pred_check_branch
          %171 = sbr.rel (%p169) target = $region16
        $region15: #{tpu_custom_call.1} parent=11 // pred_region
          %s173 = ssub.s32 1024, 1024
          %174 = vsyncadd [#allocation7], %s173
          %s175 = sshll.u32 [#allocation6], 4
          %s176 = int_to_ptr.vmem [resolvable:$true] %s175
          %181 = dma.hbm_to_vmem [thread:$0]  %s1, 1024, %s176, [#allocation7], 64, 64, 4
        $region16: #{tpu_custom_call.1} parent=11 // pred_fallthru
          _
        // Predicated region
        $region17: #{tpu_custom_call.1} parent=11 // pred_check
          %p182 = pneg %p102
        $region18: #{tpu_custom_call.1} parent=11 // pred_check_branch
          %184 = sbr.rel (%p182) target = $region20
        $region19: #{tpu_custom_call.1} parent=11 // pred_region
          %s186 = ssub.s32 1024, 1024
          %187 = vsyncadd [#allocation7], %s186
          %s188 = sshll.u32 [#allocation8], 4
          %s189 = int_to_ptr.vmem [resolvable:$true] %s188
          %194 = dma.hbm_to_vmem [thread:$0]  %s2, 1024, %s189, [#allocation7], 64, 64, 4
        $region20: #{tpu_custom_call.1} parent=11 // pred_fallthru
          _
      $region12: #{tpu_custom_call.1} parent=5 // pred_fallthru
        _
      %p195 = scmp.lt.s32.totalorder %s20, 2
      // Predicated region
      $region21: #{tpu_custom_call.1} parent=5 // pred_check
        %p196 = pneg %p195
      $region22: #{tpu_custom_call.1} parent=5 // pred_check_branch
        %198 = sbr.rel (%p196) target = $region24
      $region23: #{tpu_custom_call.1} parent=5 // pred_region
        // Predicated region
        $region25: #{tpu_custom_call.1} parent=23 // pred_check
          %p199 = pneg %p54
        $region26: #{tpu_custom_call.1} parent=23 // pred_check_branch
          %201 = sbr.rel (%p199) target = $region28
        $region27: #{tpu_custom_call.1} parent=23 // pred_region
          %s202 = sand.u32 %s44, 1
          %s203 = scalar_lea.sflag [#allocation4], %s202
          %s204 = sand.u32 %s44, 1
          %s205 = smul.addr %s204, 16
          %s206 = scalar_lea.vmem [#allocation3], %s205
          %s207 = smul.u32 4, %s27
          %s209 = ssub.s32 256, 256
          %210 = vsyncadd %s203, %s209
          %s211 = sadd.s32 %s28, %s207
          %s212 = smul.addr %s211, 64
          %s213 = scalar_lea.hbm %s0, %s212
          %s214 = sshll.u32 %s206, 4
          %s215 = int_to_ptr.vmem [resolvable:$true] %s214
          %220 = dma.hbm_to_vmem [thread:$0]  %s213, 256, %s215, %s203, 64, 64, 4
        $region28: #{tpu_custom_call.1} parent=23 // pred_fallthru
          _
        // Predicated region
        $region29: #{tpu_custom_call.1} parent=23 // pred_check
          %p221 = pneg %p122
        $region30: #{tpu_custom_call.1} parent=23 // pred_check_branch
          %223 = sbr.rel (%p221) target = $region32
        $region31: #{tpu_custom_call.1} parent=23 // pred_region
          %s224 = sand.u32 %s112, 1
          %s225 = scalar_lea.sflag [#allocation10], %s224
          %s226 = sand.u32 %s112, 1
          %s227 = smul.addr %s226, 32
          %s228 = scalar_lea.vmem [#allocation9], %s227
          %s229 = smul.u32 4, %s27
          %s231 = ssub.s32 512, 512
          %232 = vsyncadd %s225, %s231
          %s233 = smul.addr %s229, 128
          %s234 = scalar_lea.hbm %s3, %s233
          %s235 = sshll.u32 %s228, 4
          %s236 = int_to_ptr.vmem [resolvable:$true] %s235
          %241 = dma.hbm_to_vmem [thread:$0]  %s234, 512, %s236, %s225, 128, 128, 8
        $region32: #{tpu_custom_call.1} parent=23 // pred_fallthru
          _
      $region24: #{tpu_custom_call.1} parent=5 // pred_fallthru
        _
      %p242 = scmp.le.s32.totalorder 1, %s20
      %p243 = scmp.lt.s32.totalorder %s20, 3
      %p244 = pnand %p242, %p243
      %p245 = pneg %p244
      // Predicated region
      $region33: #{tpu_custom_call.1} parent=5 // pred_check
        _
      $region34: #{tpu_custom_call.1} parent=5 // pred_check_branch
        %247 = sbr.rel (%p244) target = $region36
      $region35: #{tpu_custom_call.1} parent=5 // pred_region
        %s248 = ssub.s32 %s20, 1
        %s249 = sand.u32 %s47, 1
        %s250 = scalar_lea.sflag [#allocation4], %s249
        %s251 = sand.u32 %s47, 1
        %s252 = smul.addr %s251, 16
        %s253 = scalar_lea.vmem [#allocation3], %s252
        // Predicated region
        $region37: #{tpu_custom_call.1} parent=35 // pred_check
          %p254 = pneg %p60
        $region38: #{tpu_custom_call.1} parent=35 // pred_check_branch
          %256 = sbr.rel (%p254) target = $region40
        $region39: #{tpu_custom_call.1} parent=35 // pred_region
          %257 = dma.done %s250, 256
        $region40: #{tpu_custom_call.1} parent=35 // pred_fallthru
          _
        // Predicated region
        $region41: #{tpu_custom_call.1} parent=35 // pred_check
          %p258 = pneg %p81
        $region42: #{tpu_custom_call.1} parent=35 // pred_check_branch
          %260 = sbr.rel (%p258) target = $region44
        $region43: #{tpu_custom_call.1} parent=35 // pred_region
          %261 = dma.done [#allocation7], 1024
        $region44: #{tpu_custom_call.1} parent=35 // pred_fallthru
          _
        // Predicated region
        $region45: #{tpu_custom_call.1} parent=35 // pred_check
          %p262 = pneg %p102
        $region46: #{tpu_custom_call.1} parent=35 // pred_check_branch
          %264 = sbr.rel (%p262) target = $region48
        $region47: #{tpu_custom_call.1} parent=35 // pred_region
          %265 = dma.done [#allocation7], 1024
        $region48: #{tpu_custom_call.1} parent=35 // pred_fallthru
          _
        %s266 = sand.u32 %s115, 1
        %s267 = scalar_lea.sflag [#allocation10], %s266
        %s268 = sand.u32 %s115, 1
        %s269 = smul.addr %s268, 32
        %s270 = scalar_lea.vmem [#allocation9], %s269
        // Predicated region
        $region49: #{tpu_custom_call.1} parent=35 // pred_check
          %p271 = pneg %p128
        $region50: #{tpu_custom_call.1} parent=35 // pred_check_branch
          %273 = sbr.rel (%p271) target = $region52
        $region51: #{tpu_custom_call.1} parent=35 // pred_region
          %274 = dma.done %s267, 512
        $region52: #{tpu_custom_call.1} parent=35 // pred_fallthru
          _
        %s275 = sand.u32 %s47, 1
        %s276 = scalar_lea.sflag [#allocation4], %s275
        %s277 = sand.u32 %s47, 1
        %s278 = smul.addr %s277, 16
        %s279 = scalar_lea.vmem [#allocation3], %s278
        %p280 = pneg %p60
        %p281 = pneg %p57
        %p282 = pneg %p81
        %p283 = pneg %p78
        %p284 = pneg %p102
        %p285 = pneg %p99
        %s286 = sand.u32 %s115, 1
        %s287 = scalar_lea.sflag [#allocation10], %s286
        %s288 = sand.u32 %s115, 1
        %s289 = smul.addr %s288, 32
        %s290 = scalar_lea.vmem [#allocation9], %s289
        %p291 = pneg %p128
        %p292 = pneg %p125
        %p293 = pneg %p154
        %p294 = pneg %p151
        %s295 = sand.u32 %s141, 1
        %s296 = scalar_lea.sflag [#allocation5], %s295
        %s297 = sand.u32 %s141, 1
        %s298 = smul.addr %s297, 8
        %s299 = scalar_lea.vmem [#allocation11], %s298
        %s300 = smul.u32 4, %s29
        %s301 = smul.u32 4, %s29
        %p303 = scmp.eq.s32.totalorder %s30, 0
        // Predicated region
        $region53: #{tpu_custom_call.1} parent=35 // pred_check
          %p304 = pneg %p303
        $region54: #{tpu_custom_call.1} parent=35 // pred_check_branch
          %306 = sbr.rel (%p304) target = $region56
        $region55: #{tpu_custom_call.1} parent=35 // pred_region
          %307 = vst [vmem:[#allocation2] sm:$0xff] 0.0
          %308 = vst [vmem:[#allocation2 + $0x8] sm:$0xff] 0.0
          %309 = vst [vmem:[#allocation2 + $0x10] sm:$0xff] 0.0
          %310 = vst [vmem:[#allocation2 + $0x18] sm:$0xff] 0.0
        $region56: #{tpu_custom_call.1} parent=35 // pred_fallthru
          _
        %s311 = smul.u32 %s30, 128
        %s312 = sshra.s32 %s311, 3
        %s313 = sand.u32 %s311, 7
        %s314 = smul.addr %s312, 4
        %s315 = scalar_lea.vmem [#allocation6], %s314
        %v316 = vld [vmem:[%s315] sm:$0xf]
        %v317 = vld [vmem:[%s315 + $0x4] sm:$0xf]
        %v318 = vld [vmem:[%s315 + $0x8] sm:$0xf]
        %v319 = vld [vmem:[%s315 + $0xc] sm:$0xf]
        %v320 = vld [vmem:[%s315 + $0x10] sm:$0xf]
        %v321 = vld [vmem:[%s315 + $0x14] sm:$0xf]
        %v322 = vld [vmem:[%s315 + $0x18] sm:$0xf]
        %v323 = vld [vmem:[%s315 + $0x1c] sm:$0xf]
        %v324 = vld [vmem:[%s315 + $0x20] sm:$0xf]
        %v325 = vld [vmem:[%s315 + $0x24] sm:$0xf]
        %v326 = vld [vmem:[%s315 + $0x28] sm:$0xf]
        %v327 = vld [vmem:[%s315 + $0x2c] sm:$0xf]
        %v328 = vld [vmem:[%s315 + $0x30] sm:$0xf]
        %v329 = vld [vmem:[%s315 + $0x34] sm:$0xf]
        %v330 = vld [vmem:[%s315 + $0x38] sm:$0xf]
        %v331 = vld [vmem:[%s315 + $0x3c] sm:$0xf]
        %s332 = smul.addr %s312, 4
        %s333 = scalar_lea.vmem [#allocation8], %s332
        %v334 = vld [vmem:[%s333] sm:$0xf]
        %v335 = vld [vmem:[%s333 + $0x4] sm:$0xf]
        %v336 = vld [vmem:[%s333 + $0x8] sm:$0xf]
        %v337 = vld [vmem:[%s333 + $0xc] sm:$0xf]
        %v338 = vld [vmem:[%s333 + $0x10] sm:$0xf]
        %v339 = vld [vmem:[%s333 + $0x14] sm:$0xf]
        %v340 = vld [vmem:[%s333 + $0x18] sm:$0xf]
        %v341 = vld [vmem:[%s333 + $0x1c] sm:$0xf]
        %v342 = vld [vmem:[%s333 + $0x20] sm:$0xf]
        %v343 = vld [vmem:[%s333 + $0x24] sm:$0xf]
        %v344 = vld [vmem:[%s333 + $0x28] sm:$0xf]
        %v345 = vld [vmem:[%s333 + $0x2c] sm:$0xf]
        %v346 = vld [vmem:[%s333 + $0x30] sm:$0xf]
        %v347 = vld [vmem:[%s333 + $0x34] sm:$0xf]
        %v348 = vld [vmem:[%s333 + $0x38] sm:$0xf]
        %v349 = vld [vmem:[%s333 + $0x3c] sm:$0xf]
        %v350 = vld [vmem:[%s253] sm:$0xf]
        %v351 = vld [vmem:[%s253 + $0x4] sm:$0xf]
        %v352 = vld [vmem:[%s253 + $0x8] sm:$0xf]
        %v353 = vld [vmem:[%s253 + $0xc] sm:$0xf]
        %v354 = vld [vmem:[#allocation2] sm:$0xff]
        %v355 = vld [vmem:[#allocation2 + $0x8] sm:$0xff]
        %v356 = vld [vmem:[#allocation2 + $0x10] sm:$0xff]
        %v357 = vld [vmem:[#allocation2 + $0x18] sm:$0xff]
        %v362 = vunpack.c.l.b16 %v350
        %v363 = vunpack.c.l.b16 %v351
        %v364 = vunpack.c.l.b16 %v352
        %v365 = vunpack.c.l.b16 %v353
        %v366 = vpack.c.b16 %v363, %v362
        %v367 = vpack.c.b16 %v365, %v364
        %v386 = vunpack.c.l.b16 %v334
        %v387 = vunpack.c.l.b16 %v335
        %v388 = vunpack.c.l.b16 %v336
        %v389 = vunpack.c.l.b16 %v337
        %v390 = vunpack.c.l.b16 %v338
        %v391 = vunpack.c.l.b16 %v339
        %v392 = vunpack.c.l.b16 %v340
        %v393 = vunpack.c.l.b16 %v341
        %v394 = vunpack.c.l.b16 %v342
        %v395 = vunpack.c.l.b16 %v343
        %v396 = vunpack.c.l.b16 %v344
        %v397 = vunpack.c.l.b16 %v345
        %v398 = vunpack.c.l.b16 %v346
        %v399 = vunpack.c.l.b16 %v347
        %v400 = vunpack.c.l.b16 %v348
        %v401 = vunpack.c.l.b16 %v349
        %v402 = vpack.c.b16 %v387, %v386
        %v403 = vpack.c.b16 %v389, %v388
        %v404 = vpack.c.b16 %v391, %v390
        %v405 = vpack.c.b16 %v393, %v392
        %v406 = vpack.c.b16 %v395, %v394
        %v407 = vpack.c.b16 %v397, %v396
        %v408 = vpack.c.b16 %v399, %v398
        %v409 = vpack.c.b16 %v401, %v400
        %418 = vmatprep.subr.bf16.mxu0 0
        %419 = vmatpush1.bf16.msra.mxu0 %v402
        %420 = vmatprep.subr.bf16.mxu0 0
        %421 = vmatpush1.bf16.msra.mxu0 %v403
        %422 = vmatprep.subr.bf16.mxu0 0
        %423 = vmatpush1.bf16.msra.mxu0 %v404
        %424 = vmatprep.subr.bf16.mxu0 0
        %425 = vmatpush1.bf16.msra.mxu0 %v405
        %426 = vmatprep.subr.bf16.mxu0 0
        %427 = vmatpush1.bf16.msra.mxu0 %v406
        %428 = vmatprep.subr.bf16.mxu0 0
        %429 = vmatpush1.bf16.msra.mxu0 %v407
        %430 = vmatprep.subr.bf16.mxu0 0
        %431 = vmatpush1.bf16.msra.mxu0 %v408
        %432 = vmatprep.subr.bf16.mxu0 0
        %433 = vmatpush1.bf16.msra.mxu0 %v409
        %434 = vmatprep.subr.bf16.mxu0 0
        %435 = vmatpush1.bf16.msra.mxu0 0
        %436 = vmatprep.subr.bf16.mxu0 0
        %437 = vmatpush1.bf16.msra.mxu0 0
        %438 = vmatprep.subr.bf16.mxu0 0
        %439 = vmatpush1.bf16.msra.mxu0 0
        %440 = vmatprep.subr.bf16.mxu0 0
        %441 = vmatpush1.bf16.msra.mxu0 0
        %442 = vmatprep.subr.bf16.mxu0 0
        %443 = vmatpush1.bf16.msra.mxu0 0
        %444 = vmatprep.subr.bf16.mxu0 0
        %445 = vmatpush1.bf16.msra.mxu0 0
        %446 = vmatprep.subr.bf16.mxu0 0
        %447 = vmatpush1.bf16.msra.mxu0 0
        %448 = vmatprep.subr.bf16.mxu0 0
        %449 = vmatpush1.bf16.msra.mxu0 0
        %450 = vmatprep.mubr.bf16.mxu0 0
        %451 = vmatmul.mubr.bf16.gmra.mrb[0].mxu0 %v366
        %v452 = vpop.f32.mrb[0].mxu0
        %v453 = vadd.f32 0.0, %v452
        %v454 = vpop.f32.mrb[0].mxu0
        %v455 = vpop.f32.mrb[0].mxu0
        %v456 = vadd.f32 0.0, %v455
        %v457 = vpop.f32.mrb[0].mxu0
        %458 = vmatprep.mubr.bf16.mxu0 0
        %459 = vmatmul.mubr.bf16.gmra.mrb[0].mxu0 %v367
        %v460 = vpop.f32.mrb[0].mxu0
        %v461 = vadd.f32 0.0, %v460
        %v462 = vpop.f32.mrb[0].mxu0
        %v463 = vpop.f32.mrb[0].mxu0
        %v464 = vadd.f32 0.0, %v463
        %v465 = vpop.f32.mrb[0].mxu0
        %466 = vdwg.mxu0
        %v483 = vunpack.c.l.b16 %v316
        %v484 = vunpack.c.l.b16 %v317
        %v485 = vunpack.c.l.b16 %v318
        %v486 = vunpack.c.l.b16 %v319
        %v487 = vunpack.c.l.b16 %v320
        %v488 = vunpack.c.l.b16 %v321
        %v489 = vunpack.c.l.b16 %v322
        %v490 = vunpack.c.l.b16 %v323
        %v491 = vunpack.c.l.b16 %v324
        %v492 = vunpack.c.l.b16 %v325
        %v493 = vunpack.c.l.b16 %v326
        %v494 = vunpack.c.l.b16 %v327
        %v495 = vunpack.c.l.b16 %v328
        %v496 = vunpack.c.l.b16 %v329
        %v497 = vunpack.c.l.b16 %v330
        %v498 = vunpack.c.l.b16 %v331
        %v499 = vpack.c.b16 %v484, %v483
        %v500 = vpack.c.b16 %v486, %v485
        %v501 = vpack.c.b16 %v488, %v487
        %v502 = vpack.c.b16 %v490, %v489
        %v503 = vpack.c.b16 %v492, %v491
        %v504 = vpack.c.b16 %v494, %v493
        %v505 = vpack.c.b16 %v496, %v495
        %v506 = vpack.c.b16 %v498, %v497
        %515 = vmatprep.subr.bf16.mxu0 0
        %516 = vmatpush1.bf16.msra.mxu0 %v499
        %517 = vmatprep.subr.bf16.mxu0 0
        %518 = vmatpush1.bf16.msra.mxu0 %v500
        %519 = vmatprep.subr.bf16.mxu0 0
        %520 = vmatpush1.bf16.msra.mxu0 %v501
        %521 = vmatprep.subr.bf16.mxu0 0
        %522 = vmatpush1.bf16.msra.mxu0 %v502
        %523 = vmatprep.subr.bf16.mxu0 0
        %524 = vmatpush1.bf16.msra.mxu0 %v503
        %525 = vmatprep.subr.bf16.mxu0 0
        %526 = vmatpush1.bf16.msra.mxu0 %v504
        %527 = vmatprep.subr.bf16.mxu0 0
        %528 = vmatpush1.bf16.msra.mxu0 %v505
        %529 = vmatprep.subr.bf16.mxu0 0
        %530 = vmatpush1.bf16.msra.mxu0 %v506
        %531 = vmatprep.subr.bf16.mxu0 0
        %532 = vmatpush1.bf16.msra.mxu0 0
        %533 = vmatprep.subr.bf16.mxu0 0
        %534 = vmatpush1.bf16.msra.mxu0 0
        %535 = vmatprep.subr.bf16.mxu0 0
        %536 = vmatpush1.bf16.msra.mxu0 0
        %537 = vmatprep.subr.bf16.mxu0 0
        %538 = vmatpush1.bf16.msra.mxu0 0
        %539 = vmatprep.subr.bf16.mxu0 0
        %540 = vmatpush1.bf16.msra.mxu0 0
        %541 = vmatprep.subr.bf16.mxu0 0
        %542 = vmatpush1.bf16.msra.mxu0 0
        %543 = vmatprep.subr.bf16.mxu0 0
        %544 = vmatpush1.bf16.msra.mxu0 0
        %545 = vmatprep.subr.bf16.mxu0 0
        %546 = vmatpush1.bf16.msra.mxu0 0
        %547 = vmatprep.mubr.bf16.mxu0 0
        %548 = vmatmul.mubr.bf16.gmra.mrb[0].mxu0 %v366
        %v549 = vpop.f32.mrb[0].mxu0
        %v550 = vadd.f32 %v453, %v549
        %v551 = vpop.f32.mrb[0].mxu0
        %v552 = vpop.f32.mrb[0].mxu0
        %v553 = vadd.f32 %v456, %v552
        %v554 = vpop.f32.mrb[0].mxu0
        %555 = vmatprep.mubr.bf16.mxu0 0
        %556 = vmatmul.mubr.bf16.gmra.mrb[0].mxu0 %v367
        %v557 = vpop.f32.mrb[0].mxu0
        %v558 = vadd.f32 %v461, %v557
        %v559 = vpop.f32.mrb[0].mxu0
        %v560 = vpop.f32.mrb[0].mxu0
        %v561 = vadd.f32 %v464, %v560
        %v562 = vpop.f32.mrb[0].mxu0
        %563 = vdwg.mxu0
        %v564 = vadd.f32 %v354, %v550
        %v565 = vadd.f32 %v355, %v553
        %v566 = vadd.f32 %v356, %v558
        %v567 = vadd.f32 %v357, %v561
        %568 = vst [vmem:[#allocation2] sm:$0xff] %v564
        %569 = vst [vmem:[#allocation2 + $0x8] sm:$0xff] %v565
        %570 = vst [vmem:[#allocation2 + $0x10] sm:$0xff] %v566
        %571 = vst [vmem:[#allocation2 + $0x18] sm:$0xff] %v567
        // Predicated region
        $region57: #{tpu_custom_call.1} parent=35 // pred_check
          %p572 = pneg %p303
        $region58: #{tpu_custom_call.1} parent=35 // pred_check_branch
          %574 = sbr.rel (%p572) target = $region60
        $region59: #{tpu_custom_call.1} parent=35 // pred_region
          %v575 = vld [vmem:[%s270] sm:$0xff]
          %v576 = vld [vmem:[%s270 + $0x8] sm:$0xff]
          %v577 = vld [vmem:[%s270 + $0x10] sm:$0xff]
          %v578 = vld [vmem:[%s270 + $0x18] sm:$0xff]
          %v579 = vld [vmem:[#allocation2] sm:$0xff]
          %v580 = vld [vmem:[#allocation2 + $0x8] sm:$0xff]
          %v581 = vld [vmem:[#allocation2 + $0x10] sm:$0xff]
          %v582 = vld [vmem:[#allocation2 + $0x18] sm:$0xff]
          %584 = vset.pattern.permute.xlu0 3
          %585 = vperm.xlu0 %584, %v575
          %v586 = vpop.permute.xlu0 %585
          %589 = vset.pattern.permute.xlu0 3
          %590 = vperm.xlu0 %589, %v576
          %v591 = vpop.permute.xlu0 %590
          %594 = vset.pattern.permute.xlu0 3
          %595 = vperm.xlu0 %594, %v577
          %v596 = vpop.permute.xlu0 %595
          %599 = vset.pattern.permute.xlu0 3
          %600 = vperm.xlu0 %599, %v578
          %v601 = vpop.permute.xlu0 %600
          %v603 = vmul.f32 %v579, %v586
          %v604 = vmul.f32 %v580, %v591
          %v605 = vmul.f32 %v581, %v596
          %v606 = vmul.f32 %v582, %v601
          %v607 = vsub.f32 %v603, %v575
          %v608 = vsub.f32 %v604, %v576
          %v609 = vsub.f32 %v605, %v577
          %v610 = vsub.f32 %v606, %v578
          %v611 = vmul.f32 %v607, %v607
          %v612 = vmul.f32 %v608, %v608
          %v613 = vmul.f32 %v609, %v609
          %v614 = vmul.f32 %v610, %v610
          %v615 = vlaneseq
          %v616 = vand.u32 %v615, 127
          %vm617 = vcmp.lt.s32.totalorder %v616, 3
          %v618 = vsel %vm617, %v611, 0.0
          %v619 = vsel %vm617, %v612, 0.0
          %v620 = vsel %vm617, %v613, 0.0
          %v621 = vsel %vm617, %v614, 0.0
          %v622 = vadd.f32 %v618, %v619
          %v623 = vadd.f32 %v622, %v620
          %v624 = vadd.f32 %v623, %v621
          %625 = vst [vmem:[%s299] sm:$0xff] %v624
        $region60: #{tpu_custom_call.1} parent=35 // pred_fallthru
          _
        %s626 = sand.u32 %s141, 1
        %s627 = scalar_lea.sflag [#allocation5], %s626
        %s628 = sand.u32 %s141, 1
        %s629 = smul.addr %s628, 8
        %s630 = scalar_lea.vmem [#allocation11], %s629
        // Predicated region
        $region61: #{tpu_custom_call.1} parent=35 // pred_check
          %p631 = pneg %p151
        $region62: #{tpu_custom_call.1} parent=35 // pred_check_branch
          %633 = sbr.rel (%p631) target = $region64
        $region63: #{tpu_custom_call.1} parent=35 // pred_region
          %s635 = ssub.s32 128, 128
          %636 = vsyncadd %s627, %s635
          %s637 = smul.addr %s29, 128
          %s638 = scalar_lea.hbm %s4, %s637
          %s640 = sshll.u32 %s630, 4
          %s641 = int_to_ptr.vmem [resolvable:$true] %s640
          %643 = dma.vmem_to_hbm [thread:$0]  %s641, 128, %s638, %s627
        $region64: #{tpu_custom_call.1} parent=35 // pred_fallthru
          _
      $region36: #{tpu_custom_call.1} parent=5 // pred_fallthru
        _
      %p644 = scmp.le.s32.totalorder 2, %s20
      // Predicated region
      $region65: #{tpu_custom_call.1} parent=5 // pred_check
        %p645 = pneg %p644
      $region66: #{tpu_custom_call.1} parent=5 // pred_check_branch
        %647 = sbr.rel (%p645) target = $region68
      $region67: #{tpu_custom_call.1} parent=5 // pred_region
        %s648 = ssub.s32 %s20, 2
        // Predicated region
        $region69: #{tpu_custom_call.1} parent=67 // pred_check
          %p649 = pneg %p157
        $region70: #{tpu_custom_call.1} parent=67 // pred_check_branch
          %651 = sbr.rel (%p649) target = $region72
        $region71: #{tpu_custom_call.1} parent=67 // pred_region
          %s652 = sand.u32 %s142, 1
          %s653 = scalar_lea.sflag [#allocation5], %s652
          %s654 = sand.u32 %s142, 1
          %s655 = smul.addr %s654, 8
          %s656 = scalar_lea.vmem [#allocation11], %s655
          %657 = dma.done %s653, 128
        $region72: #{tpu_custom_call.1} parent=67 // pred_fallthru
          _
      $region68: #{tpu_custom_call.1} parent=5 // pred_fallthru
        _
    $region6: #{tpu_custom_call.1} parent=1 // loop_footer
      %s24 = sadd.s32 1, %s20
    $region7: #{tpu_custom_call.1} parent=1 // loop_footer_branch
      %19 = sbr.rel target = $region3
    $region8: #{tpu_custom_call.1} parent=1 // loop_exit
      _
    %658 = vsyncpa [#allocation4], 1
    %s659 = scalar_lea.sflag [#allocation4], 1
    %660 = vsyncpa %s659, 1
    %661 = vsyncpa [#allocation7], 1
    %662 = vsyncpa [#allocation10], 1
    %s663 = scalar_lea.sflag [#allocation10], 1
    %664 = vsyncpa %s663, 1
    %665 = vsyncpa [#allocation5], 1
    %s666 = scalar_lea.sflag [#allocation5], 1
    %667 = vsyncpa %s666, 1

</llo_original>
